<compile_context>
chip_gen: v5e
topology: v5e:2x2
jax: 0.10.0
libtpu: 0.0.40
codegen_flags: <defaults>
</compile_context>

<pallas_src>
import functools

import jax
import jax.numpy as jnp
from jax.experimental import pallas as pl
from jax.experimental.pallas import tpu as pltpu


def _round_up(x, m):
    return (x + m - 1) // m * m


def _choose_row_tile(n, k, adj_itemsize, budget_bytes=8 * 2**20):
    """Largest power-of-two row tile whose (K, TM, N) adj block fits the budget."""
    n8 = _round_up(n, 8)
    for tm in (512, 256, 128, 64, 32, 16, 8):
        if tm <= n8 and k * tm * n8 * adj_itemsize <= budget_bytes:
            return tm
    return 8


def _p_y_gs_kernel(z_mu_ref, z_lv_ref, eps_ref, w_ref, b_ref, adjs_ref, o_ref):
    matmul_dt = adjs_ref.dtype  # bf16 streaming / MXU dtype

    # --- shared "support" = (mu + exp(0.5*logvar) * mean_eps) @ W, in f32 ------
    # Tiny ((N, D) @ (D, Hp), D ~ 32); recomputed per row tile and hidden under
    # the adjacency DMA stream.  Keeps the kernel megacore-safe (no pid==0 init).
    z = z_mu_ref[...] + jnp.exp(0.5 * z_lv_ref[...]) * eps_ref[...]
    support = jnp.dot(z, w_ref[...], preferred_element_type=jnp.float32)
    support = support.astype(matmul_dt)

    # --- row tile of the summed adjacency (comm + diff) -------------------------
    # Unrolled f32 add chain over the (static) K axis: VPU filler under the DMA,
    # and the live intermediate stays a single (tm, Np) tile.
    k_total = adjs_ref.shape[0]
    adj32 = adjs_ref[0].astype(jnp.float32)
    for k in range(1, k_total):
        adj32 = adj32 + adjs_ref[k].astype(jnp.float32)
    adj_tile = adj32.astype(matmul_dt)

    # --- big MXU matmul with f32 accumulation; bias added once per tile --------
    out = jnp.dot(adj_tile, support, preferred_element_type=jnp.float32)
    o_ref[...] = (out + b_ref[...]).astype(o_ref.dtype)


@functools.partial(jax.jit, static_argnames=("matmul_dtype",))
def p_y_gs_z1_z2_forward(z1_mu, z1_logvar, z2_mu, z2_logvar,
                         adjs_stacked, w, b, eps1_mean, eps2_mean,
                         *, matmul_dtype=jnp.bfloat16):
    N, z1d = z1_mu.shape
    z2d = z2_mu.shape[1]
    D = z1d + z2d
    K = adjs_stacked.shape[0]
    H = w.shape[1]

    # Fuse the two small projections into one: concat along features is exact.
    z_mu = jnp.concatenate([z1_mu, z2_mu], axis=1).astype(jnp.float32)
    z_lv = jnp.concatenate([z1_logvar, z2_logvar], axis=1).astype(jnp.float32)
    eps = jnp.concatenate([eps1_mean, eps2_mean], axis=1).astype(jnp.float32)

    adj_dt = jnp.dtype(matmul_dtype)
    Hp = _round_up(H, 128)                        # lane-dense output columns
    tm = _choose_row_tile(N, K, adj_dt.itemsize)  # adjacency row tile
    Np = _round_up(N, tm)                         # pad rows to a whole # of tiles
    num_tiles = Np // tm

    def pad2(x, r, c):
        return jnp.pad(x, ((0, r - x.shape[0]), (0, c - x.shape[1])))

    # Zero padding is exact: padded rows/cols of adj and padded W/b columns
    # contribute zero; padded z rows give support rows of exactly zero.
    z_mu_p = pad2(z_mu, Np, D)
    z_lv_p = pad2(z_lv, Np, D)
    eps_p = pad2(eps, Np, D)
    w_p = pad2(w.astype(jnp.float32), D, Hp)
    b_p = pad2(b.reshape(1, -1).astype(jnp.float32), 1, Hp)
    adjs_p = jnp.pad(adjs_stacked.astype(adj_dt),
                     ((0, 0), (0, Np - N), (0, Np - N)))

    # Rough VMEM budget (double-buffered blocks + in-kernel intermediates).
    itm = adj_dt.itemsize
    adj_block = K * tm * Np * itm
    out_block = tm * Hp * 4
    resident = 3 * Np * D * 4 + D * Hp * 4 + Hp * 4
    scratch = tm * Np * 4 + Np * Hp * (4 + itm) + tm * Hp * 4
    est = 2 * (adj_block + out_block + resident) + scratch + (4 << 20)
    vmem_limit = int(min(max(est, 32 * 2**20), 64 * 2**20))

    const = lambda shape: pl.BlockSpec(shape, lambda i: (0,) * len(shape))

    out_p = pl.pallas_call(
        _p_y_gs_kernel,
        out_shape=jax.ShapeDtypeStruct((Np, Hp), jnp.float32),
        grid=(num_tiles,),
        in_specs=[
            const((Np, D)),                                  # z_mu   (resident)
            const((Np, D)),                                  # z_logvar
            const((Np, D)),                                  # eps mean
            const((D, Hp)),                                  # W (concat, padded)
            const((1, Hp)),                                  # bias (padded)
            pl.BlockSpec((K, tm, Np), lambda i: (0, i, 0)),  # adjacency row tile
        ],
        out_specs=pl.BlockSpec((tm, Hp), lambda i: (i, 0)),
        compiler_params=pltpu.CompilerParams(
            dimension_semantics=("parallel",),
            vmem_limit_bytes=vmem_limit),
    )(z_mu_p, z_lv_p, eps_p, w_p, b_p, adjs_p)

    return out_p[:N, :H]


if __name__ == "__main__":
    # Small, module-consistent shapes (N chosen so the grid has >1 row tile).
    N = 24           # number of graph nodes
    Z1_DIM = 16      # args.z1_dim
    Z2_DIM = 16      # args.z2_dim
    Y_GN_DIM = 32    # args.y_gn_dim
    SAMPLE_FREQ = 3  # args.sample_freq
    N_COMM, N_DIFF = 2, 1

    key = jax.random.PRNGKey(0)
    keys = jax.random.split(key, 10)

    z1_mu = jax.random.normal(keys[0], (N, Z1_DIM), jnp.float32)
    z1_logvar = 0.1 * jax.random.normal(keys[1], (N, Z1_DIM), jnp.float32)
    z2_mu = jax.random.normal(keys[2], (N, Z2_DIM), jnp.float32)
    z2_logvar = 0.1 * jax.random.normal(keys[3], (N, Z2_DIM), jnp.float32)

    # Adjacencies stored / streamed in bf16 (dominant HBM stream).
    comm_adjs = jax.random.uniform(keys[4], (N_COMM, N, N), jnp.float32)
    diff_adjs = jax.random.uniform(keys[5], (N_DIFF, N, N), jnp.float32)
    adjs_stacked = jnp.concatenate([comm_adjs, diff_adjs], axis=0).astype(jnp.bfloat16)

    # Deterministic GCN-layer parameters (xavier-ish scale).
    D = Z1_DIM + Z2_DIM
    w_scale = (6.0 / (D + Y_GN_DIM)) ** 0.5
    W = w_scale * jax.random.uniform(keys[6], (D, Y_GN_DIM), jnp.float32,
                                     minval=-1.0, maxval=1.0)
    b = jnp.zeros((1, Y_GN_DIM), jnp.float32)

    # training=True reparameterization noise: mean over sample_freq eps draws.
    # TODO(synk): the in-module torch.randn_like RNG has no exact Pallas analogue;
    # noise is drawn host-side (jax.random) and only its mean enters the kernel.
    eps1 = jax.random.normal(keys[7], (SAMPLE_FREQ, N, Z1_DIM), jnp.float32)
    eps2 = jax.random.normal(keys[8], (SAMPLE_FREQ, N, Z2_DIM), jnp.float32)
    eps1_mean = jnp.mean(eps1, axis=0)
    eps2_mean = jnp.mean(eps2, axis=0)
    # TODO(synk): eval mode (self.training=False) is the eps1_mean=eps2_mean=0 special case.

    out = p_y_gs_z1_z2_forward(z1_mu, z1_logvar, z2_mu, z2_logvar,
                               adjs_stacked, W, b, eps1_mean, eps2_mean)
    out = jax.block_until_ready(out)

    # Reference with the same numerics the kernel uses on the big matmul
    # (bf16 adjacency/support, f32 accumulation) so the tolerance stays tight.
    Z1_ref = z1_mu + jnp.exp(0.5 * z1_logvar) * eps1_mean
    Z2_ref = z2_mu + jnp.exp(0.5 * z2_logvar) * eps2_mean
    X_ref = jnp.concatenate([Z1_ref, Z2_ref], axis=1)
    support_ref = jnp.dot(X_ref, W,
                          preferred_element_type=jnp.float32).astype(jnp.bfloat16)
    adj_ref = jnp.sum(adjs_stacked.astype(jnp.float32), axis=0).astype(jnp.bfloat16)
    ref = jnp.dot(adj_ref, support_ref, preferred_element_type=jnp.float32) + b

    assert out.shape == (N, Y_GN_DIM)
    assert jnp.allclose(out, ref, atol=3e-2, rtol=3e-2), \
        float(jnp.max(jnp.abs(out - ref)))

    print("KERNEL_OK")
</pallas_src>

<mosaic_0001>
module attributes {stable_mosaic.version = 11 : i64} {
  func.func @_p_y_gs_kernel(%arg0: i32, %arg1: memref<32x32xf32, #tpu.memory_space<vmem>>, %arg2: memref<32x32xf32, #tpu.memory_space<vmem>>, %arg3: memref<32x32xf32, #tpu.memory_space<vmem>>, %arg4: memref<32x128xf32, #tpu.memory_space<vmem>>, %arg5: memref<1x128xf32, #tpu.memory_space<vmem>>, %arg6: memref<3x16x32xbf16, #tpu.memory_space<vmem>>, %arg7: memref<16x128xf32, #tpu.memory_space<vmem>>) attributes {dimension_semantics = [#tpu.dimension_semantics<parallel>], iteration_bounds = array<i64: 2>, scalar_prefetch = 0 : i64, scratch_operands = 0 : i64, tpu.core_type = #tpu.core_type<tc>, window_params = [{pipeline_mode = #tpu.pipeline_mode<synchronous>, transform_indices = @transform_0, window_bounds = array<i64: 32, 32>}, {pipeline_mode = #tpu.pipeline_mode<synchronous>, transform_indices = @transform_1, window_bounds = array<i64: 32, 32>}, {pipeline_mode = #tpu.pipeline_mode<synchronous>, transform_indices = @transform_2, window_bounds = array<i64: 32, 32>}, {pipeline_mode = #tpu.pipeline_mode<synchronous>, transform_indices = @transform_3, window_bounds = array<i64: 32, 128>}, {pipeline_mode = #tpu.pipeline_mode<synchronous>, transform_indices = @transform_4, window_bounds = array<i64: 1, 128>}, {transform_indices = @transform_5, window_bounds = array<i64: 3, 16, 32>}, {transform_indices = @transform_6, window_bounds = array<i64: 16, 128>}]} {
    %c0 = arith.constant 0 : index
    %c0_0 = arith.constant 0 : index
    %0 = vector.load %arg1[%c0, %c0_0] : memref<32x32xf32, #tpu.memory_space<vmem>>, vector<32x32xf32>
    %c0_1 = arith.constant 0 : index
    %c0_2 = arith.constant 0 : index
    %1 = vector.load %arg2[%c0_1, %c0_2] : memref<32x32xf32, #tpu.memory_space<vmem>>, vector<32x32xf32>
    %cst = arith.constant 5.000000e-01 : f32
    %2 = vector.broadcast %cst : f32 to vector<32x32xf32>
    %3 = arith.mulf %2, %1 : vector<32x32xf32>
    %4 = math.exp %3 : vector<32x32xf32>
    %c0_3 = arith.constant 0 : index
    %c0_4 = arith.constant 0 : index
    %5 = vector.load %arg3[%c0_3, %c0_4] : memref<32x32xf32, #tpu.memory_space<vmem>>, vector<32x32xf32>
    %6 = arith.mulf %4, %5 : vector<32x32xf32>
    %7 = arith.addf %0, %6 : vector<32x32xf32>
    %c0_5 = arith.constant 0 : index
    %c0_6 = arith.constant 0 : index
    %8 = vector.load %arg4[%c0_5, %c0_6] : memref<32x128xf32, #tpu.memory_space<vmem>>, vector<32x128xf32>
    %cst_7 = arith.constant dense<0.000000e+00> : vector<32x128xf32>
    %9 = tpu.matmul %7, %8, %cst_7 {dimension_numbers = #tpu.dot_dimension_numbers<[1], [0], [0], [1], [0, 0, 1, 1], [], []>} : vector<32x32xf32>, vector<32x128xf32>, vector<32x128xf32> -> vector<32x128xf32>
    %10 = arith.truncf %9 : vector<32x128xf32> to vector<32x128xbf16>
    %c0_8 = arith.constant 0 : index
    %c0_9 = arith.constant 0 : index
    %c0_10 = arith.constant 0 : index
    %11 = vector.load %arg6[%c0_8, %c0_9, %c0_10] : memref<3x16x32xbf16, #tpu.memory_space<vmem>>, vector<1x16x32xbf16>
    %12 = vector.shape_cast %11 : vector<1x16x32xbf16> to vector<16x32xbf16>
    %13 = arith.extf %12 : vector<16x32xbf16> to vector<16x32xf32>
    %c1 = arith.constant 1 : index
    %c0_11 = arith.constant 0 : index
    %c0_12 = arith.constant 0 : index
    %14 = vector.load %arg6[%c1, %c0_11, %c0_12] : memref<3x16x32xbf16, #tpu.memory_space<vmem>>, vector<1x16x32xbf16>
    %15 = vector.shape_cast %14 : vector<1x16x32xbf16> to vector<16x32xbf16>
    %16 = arith.extf %15 : vector<16x32xbf16> to vector<16x32xf32>
    %17 = arith.addf %13, %16 : vector<16x32xf32>
    %c2 = arith.constant 2 : index
    %c0_13 = arith.constant 0 : index
    %c0_14 = arith.constant 0 : index
    %18 = vector.load %arg6[%c2, %c0_13, %c0_14] : memref<3x16x32xbf16, #tpu.memory_space<vmem>>, vector<1x16x32xbf16>
    %19 = vector.shape_cast %18 : vector<1x16x32xbf16> to vector<16x32xbf16>
    %20 = arith.extf %19 : vector<16x32xbf16> to vector<16x32xf32>
    %21 = arith.addf %17, %20 : vector<16x32xf32>
    %22 = arith.truncf %21 : vector<16x32xf32> to vector<16x32xbf16>
    %cst_15 = arith.constant dense<0.000000e+00> : vector<16x128xf32>
    %23 = tpu.matmul %22, %10, %cst_15 {dimension_numbers = #tpu.dot_dimension_numbers<[1], [0], [0], [1], [0, 0, 1, 1], [], []>} : vector<16x32xbf16>, vector<32x128xbf16>, vector<16x128xf32> -> vector<16x128xf32>
    %c0_16 = arith.constant 0 : index
    %c0_17 = arith.constant 0 : index
    %24 = vector.load %arg5[%c0_16, %c0_17] : memref<1x128xf32, #tpu.memory_space<vmem>>, vector<1x128xf32>
    %25 = vector.broadcast %24 : vector<1x128xf32> to vector<16x128xf32>
    %26 = arith.addf %23, %25 : vector<16x128xf32>
    %c0_18 = arith.constant 0 : index
    %c0_19 = arith.constant 0 : index
    %27 = vector.load %arg7[%c0_18, %c0_19] : memref<16x128xf32, #tpu.memory_space<vmem>>, vector<16x128xf32>
    tpu.vector_store %arg7[%c0_18, %c0_19], %26 {strides = array<i32>} : memref<16x128xf32, #tpu.memory_space<vmem>>, vector<16x128xf32>,
    return
  }
  func.func @transform_0(%arg0: i32) -> (i32, i32) {
    %c0_i32 = arith.constant 0 : i32
    %c0_i32_0 = arith.constant 0 : i32
    %c0_i32_1 = arith.constant 0 : i32
    return %c0_i32, %c0_i32_0 : i32, i32
  }
  func.func @transform_1(%arg0: i32) -> (i32, i32) {
    %c0_i32 = arith.constant 0 : i32
    %c0_i32_0 = arith.constant 0 : i32
    %c0_i32_1 = arith.constant 0 : i32
    return %c0_i32, %c0_i32_0 : i32, i32
  }
  func.func @transform_2(%arg0: i32) -> (i32, i32) {
    %c0_i32 = arith.constant 0 : i32
    %c0_i32_0 = arith.constant 0 : i32
    %c0_i32_1 = arith.constant 0 : i32
    return %c0_i32, %c0_i32_0 : i32, i32
  }
  func.func @transform_3(%arg0: i32) -> (i32, i32) {
    %c0_i32 = arith.constant 0 : i32
    %c0_i32_0 = arith.constant 0 : i32
    %c0_i32_1 = arith.constant 0 : i32
    return %c0_i32, %c0_i32_0 : i32, i32
  }
  func.func @transform_4(%arg0: i32) -> (i32, i32) {
    %c0_i32 = arith.constant 0 : i32
    %c0_i32_0 = arith.constant 0 : i32
    %c0_i32_1 = arith.constant 0 : i32
    return %c0_i32, %c0_i32_0 : i32, i32
  }
  func.func @transform_5(%arg0: i32) -> (i32, i32, i32) {
    %c0_i32 = arith.constant 0 : i32
    %c0_i32_0 = arith.constant 0 : i32
    %c0_i32_1 = arith.constant 0 : i32
    return %c0_i32, %arg0, %c0_i32_0 : i32, i32, i32
  }
  func.func @transform_6(%arg0: i32) -> (i32, i32) {
    %c0_i32 = arith.constant 0 : i32
    %c0_i32_0 = arith.constant 0 : i32
    return %arg0, %c0_i32 : i32, i32
  }
}

</mosaic_0001>

<llo_original>
// kernel: p_y_gs_z1_z2_forward.1
$region0: #{p_y_gs_z1_z2_forward.1}
  #allocation0 [shape = 'u32[]', space=smem, size = 0x4, offset = 0x4, fixed_abs, tag = 'smem constant byte address 0x4 - core index']
  #allocation1 [shape = 'u32[72,128]{1,0:T(1,128)}', space=vmem, size = 0x9000, scoped, tag = 'internal scratch']
  %s0 = inlined_call_operand.vmem [shape: f32[32,32], index: 0, kind: input, shape index: {}]
  %s1 = inlined_call_operand.vmem [shape: f32[32,32], index: 1, kind: input, shape index: {}]
  %s2 = inlined_call_operand.vmem [shape: f32[32,32], index: 2, kind: input, shape index: {}]
  %s3 = inlined_call_operand.vmem [shape: f32[32,128], index: 3, kind: input, shape index: {}]
  %s4 = inlined_call_operand.vmem [shape: f32[1,128], index: 4, kind: input, shape index: {}]
  %s5 = inlined_call_operand.vmem [shape: bf16[3,32,32], index: 5, kind: input, shape index: {}]
  %s6 = inlined_call_operand.vmem [shape: f32[32,128], index: 6, kind: output, shape index: {}]
  %s7 = sld [smem:[#allocation0]]
  $region98: #{p_y_gs_z1_z2_forward.1} parent=0
    _
  %s9 = ssub.s32 1, %s7
  %s10 = scalar_select 0, %s9, %s7
  $region1: #{p_y_gs_z1_z2_forward.1} parent=0
    #allocation2 [shape = 'u8[24576]{0}', space=vmem, size = 0x6000, scoped, tag = 'input window, operand 5']
    loop: start=0, step=1, limit=4
    $region2: #{p_y_gs_z1_z2_forward.1} parent=1 // loop_pre_header
      _
    $region3: #{p_y_gs_z1_z2_forward.1} parent=1 // loop_header
      %s12 = sphi 0, %s16
      %p13 = scmp.ge.s32.totalorder %s12, 4
      %s20 = sphi 0, %s20
      %s22 = sphi 0, %s20
      %s23 = sphi 0, %s22
      %s37 = sphi 0, %s23
      %s41 = sphi 0, %s41
      %s43 = sphi 0, %s41
      %s44 = sphi 0, %s43
      %s58 = sphi 0, %s44
      %s62 = sphi 0, %s62
      %s64 = sphi 0, %s62
      %s65 = sphi 0, %s64
      %s79 = sphi 0, %s65
      %s83 = sphi 0, %s83
      %s85 = sphi 0, %s83
      %s86 = sphi 0, %s85
      %s100 = sphi 0, %s86
      %s104 = sphi 0, %s104
      %s106 = sphi 0, %s104
      %s107 = sphi 0, %s106
      %s121 = sphi 0, %s107
      %s127 = sphi 0, %s129
      %s130 = sphi 0, %s127
      %s131 = sphi 0, %s130
      %s147 = sphi 0, %s131
      %s153 = sphi 0, %s155
      %s156 = sphi 0, %s153
      %s157 = sphi 0, %s156
      %s173 = sphi 0, %s157
    $region4: #{p_y_gs_z1_z2_forward.1} parent=1 // loop_header_branch
      %15 = sbr.rel (%p13) target = $region8
    $region5: #{p_y_gs_z1_z2_forward.1} parent=1 // loop_body
      %s17 = ssub.s32 %s12, 1
      %s18 = ssub.s32 %s12, 2
      %s19 = sadd.s32 %s12, 1
      %s21 = sadd.s32 %s20, 1
      %p24 = scmp.eq.s32.totalorder %s12, 1
      %p25 = scmp.ne.s32.totalorder %s20, %s22
      %p26 = scmp.eq.s32.totalorder %s12, 0
      %p27 = por %p25, %p26
      %p28 = scmp.ne.s32.totalorder %s20, %s22
      %p29 = scmp.eq.s32.totalorder %s17, 1
      %p30 = por %p28, %p29
      %p31 = scmp.ne.s32.totalorder %s22, %s23
      %p32 = scmp.eq.s32.totalorder %s17, 0
      %p33 = por %p31, %p32
      %p34 = scmp.ne.s32.totalorder %s22, %s23
      %p35 = scmp.eq.s32.totalorder %s18, 1
      %p36 = por %p34, %p35
      %p38 = scmp.ne.s32.totalorder %s23, %s37
      %p39 = scmp.eq.s32.totalorder %s18, 0
      %p40 = por %p38, %p39
      %s42 = sadd.s32 %s41, 1
      %p45 = scmp.eq.s32.totalorder %s12, 1
      %p46 = scmp.ne.s32.totalorder %s41, %s43
      %p47 = scmp.eq.s32.totalorder %s12, 0
      %p48 = por %p46, %p47
      %p49 = scmp.ne.s32.totalorder %s41, %s43
      %p50 = scmp.eq.s32.totalorder %s17, 1
      %p51 = por %p49, %p50
      %p52 = scmp.ne.s32.totalorder %s43, %s44
      %p53 = scmp.eq.s32.totalorder %s17, 0
      %p54 = por %p52, %p53
      %p55 = scmp.ne.s32.totalorder %s43, %s44
      %p56 = scmp.eq.s32.totalorder %s18, 1
      %p57 = por %p55, %p56
      %p59 = scmp.ne.s32.totalorder %s44, %s58
      %p60 = scmp.eq.s32.totalorder %s18, 0
      %p61 = por %p59, %p60
      %s63 = sadd.s32 %s62, 1
      %p66 = scmp.eq.s32.totalorder %s12, 1
      %p67 = scmp.ne.s32.totalorder %s62, %s64
      %p68 = scmp.eq.s32.totalorder %s12, 0
      %p69 = por %p67, %p68
      %p70 = scmp.ne.s32.totalorder %s62, %s64
      %p71 = scmp.eq.s32.totalorder %s17, 1
      %p72 = por %p70, %p71
      %p73 = scmp.ne.s32.totalorder %s64, %s65
      %p74 = scmp.eq.s32.totalorder %s17, 0
      %p75 = por %p73, %p74
      %p76 = scmp.ne.s32.totalorder %s64, %s65
      %p77 = scmp.eq.s32.totalorder %s18, 1
      %p78 = por %p76, %p77
      %p80 = scmp.ne.s32.totalorder %s65, %s79
      %p81 = scmp.eq.s32.totalorder %s18, 0
      %p82 = por %p80, %p81
      %s84 = sadd.s32 %s83, 1
      %p87 = scmp.eq.s32.totalorder %s12, 1
      %p88 = scmp.ne.s32.totalorder %s83, %s85
      %p89 = scmp.eq.s32.totalorder %s12, 0
      %p90 = por %p88, %p89
      %p91 = scmp.ne.s32.totalorder %s83, %s85
      %p92 = scmp.eq.s32.totalorder %s17, 1
      %p93 = por %p91, %p92
      %p94 = scmp.ne.s32.totalorder %s85, %s86
      %p95 = scmp.eq.s32.totalorder %s17, 0
      %p96 = por %p94, %p95
      %p97 = scmp.ne.s32.totalorder %s85, %s86
      %p98 = scmp.eq.s32.totalorder %s18, 1
      %p99 = por %p97, %p98
      %p101 = scmp.ne.s32.totalorder %s86, %s100
      %p102 = scmp.eq.s32.totalorder %s18, 0
      %p103 = por %p101, %p102
      %s105 = sadd.s32 %s104, 1
      %p108 = scmp.eq.s32.totalorder %s12, 1
      %p109 = scmp.ne.s32.totalorder %s104, %s106
      %p110 = scmp.eq.s32.totalorder %s12, 0
      %p111 = por %p109, %p110
      %p112 = scmp.ne.s32.totalorder %s104, %s106
      %p113 = scmp.eq.s32.totalorder %s17, 1
      %p114 = por %p112, %p113
      %p115 = scmp.ne.s32.totalorder %s106, %s107
      %p116 = scmp.eq.s32.totalorder %s17, 0
      %p117 = por %p115, %p116
      %p118 = scmp.ne.s32.totalorder %s106, %s107
      %p119 = scmp.eq.s32.totalorder %s18, 1
      %p120 = por %p118, %p119
      %p122 = scmp.ne.s32.totalorder %s107, %s121
      %p123 = scmp.eq.s32.totalorder %s18, 0
      %p124 = por %p122, %p123
      %s125 = ssub.s32 %s12, %s19
      %p126 = scmp.eq.s32.totalorder %s125, 0
      %s128 = sadd.s32 %s127, 1
      %s129 = scalar_select %p126, %s127, %s128
      %p132 = pneg %p126
      %p133 = scmp.eq.s32.totalorder %s12, 1
      %p134 = por %p132, %p133
      %p135 = scmp.ne.s32.totalorder %s127, %s130
      %p136 = scmp.eq.s32.totalorder %s12, 0
      %p137 = por %p135, %p136
      %p138 = scmp.ne.s32.totalorder %s127, %s130
      %p139 = scmp.eq.s32.totalorder %s17, 1
      %p140 = por %p138, %p139
      %p141 = scmp.ne.s32.totalorder %s130, %s131
      %p142 = scmp.eq.s32.totalorder %s17, 0
      %p143 = por %p141, %p142
      %p144 = scmp.ne.s32.totalorder %s130, %s131
      %p145 = scmp.eq.s32.totalorder %s18, 1
      %p146 = por %p144, %p145
      %p148 = scmp.ne.s32.totalorder %s131, %s147
      %p149 = scmp.eq.s32.totalorder %s18, 0
      %p150 = por %p148, %p149
      %s151 = ssub.s32 %s12, %s19
      %p152 = scmp.eq.s32.totalorder %s151, 0
      %s154 = sadd.s32 %s153, 1
      %s155 = scalar_select %p152, %s153, %s154
      %p158 = pneg %p152
      %p159 = scmp.eq.s32.totalorder %s12, 1
      %p160 = por %p158, %p159
      %p161 = scmp.ne.s32.totalorder %s153, %s156
      %p162 = scmp.eq.s32.totalorder %s12, 0
      %p163 = por %p161, %p162
      %p164 = scmp.ne.s32.totalorder %s153, %s156
      %p165 = scmp.eq.s32.totalorder %s17, 1
      %p166 = por %p164, %p165
      %p167 = scmp.ne.s32.totalorder %s156, %s157
      %p168 = scmp.eq.s32.totalorder %s17, 0
      %p169 = por %p167, %p168
      %p170 = scmp.ne.s32.totalorder %s156, %s157
      %p171 = scmp.eq.s32.totalorder %s18, 1
      %p172 = por %p170, %p171
      %p174 = scmp.ne.s32.totalorder %s157, %s173
      %p175 = scmp.eq.s32.totalorder %s18, 0
      %p176 = por %p174, %p175
      %p177 = scmp.le.s32.totalorder 1, %s12
      %p178 = scmp.lt.s32.totalorder %s12, 3
      %p179 = pnand %p177, %p178
      %p180 = pneg %p179
      // Predicated region
      $region9: #{p_y_gs_z1_z2_forward.1} parent=5 // pred_check
        _
      $region10: #{p_y_gs_z1_z2_forward.1} parent=5 // pred_check_branch
        %182 = sbr.rel (%p179) target = $region12
      $region11: #{p_y_gs_z1_z2_forward.1} parent=5 // pred_region
        %s183 = ssub.s32 %s12, 1
        // Predicated region
        $region13: #{p_y_gs_z1_z2_forward.1} parent=11 // pred_check
          %p184 = pneg %p33
        $region14: #{p_y_gs_z1_z2_forward.1} parent=11 // pred_check_branch
          %186 = sbr.rel (%p184) target = $region16
        $region15: #{p_y_gs_z1_z2_forward.1} parent=11 // pred_region
          _
        $region16: #{p_y_gs_z1_z2_forward.1} parent=11 // pred_fallthru
          _
        // Predicated region
        $region17: #{p_y_gs_z1_z2_forward.1} parent=11 // pred_check
          %p187 = pneg %p54
        $region18: #{p_y_gs_z1_z2_forward.1} parent=11 // pred_check_branch
          %189 = sbr.rel (%p187) target = $region20
        $region19: #{p_y_gs_z1_z2_forward.1} parent=11 // pred_region
          _
        $region20: #{p_y_gs_z1_z2_forward.1} parent=11 // pred_fallthru
          _
        // Predicated region
        $region21: #{p_y_gs_z1_z2_forward.1} parent=11 // pred_check
          %p190 = pneg %p75
        $region22: #{p_y_gs_z1_z2_forward.1} parent=11 // pred_check_branch
          %192 = sbr.rel (%p190) target = $region24
        $region23: #{p_y_gs_z1_z2_forward.1} parent=11 // pred_region
          _
        $region24: #{p_y_gs_z1_z2_forward.1} parent=11 // pred_fallthru
          _
        // Predicated region
        $region25: #{p_y_gs_z1_z2_forward.1} parent=11 // pred_check
          %p193 = pneg %p96
        $region26: #{p_y_gs_z1_z2_forward.1} parent=11 // pred_check_branch
          %195 = sbr.rel (%p193) target = $region28
        $region27: #{p_y_gs_z1_z2_forward.1} parent=11 // pred_region
          _
        $region28: #{p_y_gs_z1_z2_forward.1} parent=11 // pred_fallthru
          _
        // Predicated region
        $region29: #{p_y_gs_z1_z2_forward.1} parent=11 // pred_check
          %p196 = pneg %p117
        $region30: #{p_y_gs_z1_z2_forward.1} parent=11 // pred_check_branch
          %198 = sbr.rel (%p196) target = $region32
        $region31: #{p_y_gs_z1_z2_forward.1} parent=11 // pred_region
          _
        $region32: #{p_y_gs_z1_z2_forward.1} parent=11 // pred_fallthru
          _
      $region12: #{p_y_gs_z1_z2_forward.1} parent=5 // pred_fallthru
        _
      %p199 = scmp.lt.s32.totalorder %s12, 2
      // Predicated region
      $region33: #{p_y_gs_z1_z2_forward.1} parent=5 // pred_check
        %p200 = pneg %p199
      $region34: #{p_y_gs_z1_z2_forward.1} parent=5 // pred_check_branch
        %202 = sbr.rel (%p200) target = $region36
      $region35: #{p_y_gs_z1_z2_forward.1} parent=5 // pred_region
        // Predicated region
        $region37: #{p_y_gs_z1_z2_forward.1} parent=35 // pred_check
          %p203 = pneg %p137
        $region38: #{p_y_gs_z1_z2_forward.1} parent=35 // pred_check_branch
          %205 = sbr.rel (%p203) target = $region40
        $region39: #{p_y_gs_z1_z2_forward.1} parent=35 // pred_region
          %s206 = sand.u32 %s127, 1
          %s207 = sand.u32 %s127, 1
          %s208 = smul.addr %s207, 24
          %s209 = scalar_lea.vmem [#allocation2], %s208
          %s210 = smul.u32 2, %s12
          %s211 = smul.addr %s210, 4
          %s212 = scalar_lea.vmem %s5, %s211
          // Predicated region
          $region41: #{p_y_gs_z1_z2_forward.1} parent=39 // pred_check
            _
          $region42: #{p_y_gs_z1_z2_forward.1} parent=39 // pred_check_branch
            %214 = sbr.rel (0) target = $region44
          $region43: #{p_y_gs_z1_z2_forward.1} parent=39 // pred_region
            // Predicated region
            $region45: #{p_y_gs_z1_z2_forward.1} parent=43 // pred_check
              _
            $region46: #{p_y_gs_z1_z2_forward.1} parent=43 // pred_check_branch
              %216 = sbr.rel target = $region48
            $region47: #{p_y_gs_z1_z2_forward.1} parent=43 // pred_region
              // Predicated region
              $region60: #{p_y_gs_z1_z2_forward.1} parent=47 // pred_check
                _
              $region61: #{p_y_gs_z1_z2_forward.1} parent=47 // pred_check_branch
                %242 = sbr.rel (0) target = $region63
              $region62: #{p_y_gs_z1_z2_forward.1} parent=47 // pred_region
                loop: start=0, step=1, limit=1
                $region64: #{p_y_gs_z1_z2_forward.1} parent=62 // loop_pre_header
                  _
                $region65: #{p_y_gs_z1_z2_forward.1} parent=62 // loop_header
                  %s244 = sphi 0, %s248
                  %p245 = scmp.ge.s32.totalorder %s244, 1
                  %s249 = sphi %s212, %s212
                  %s250 = sphi %s209, %s209
                $region66: #{p_y_gs_z1_z2_forward.1} parent=62 // loop_header_branch
                  %247 = sbr.rel (%p245) target = $region70
                $region67: #{p_y_gs_z1_z2_forward.1} parent=62 // loop_body
                  _
                $region68: #{p_y_gs_z1_z2_forward.1} parent=62 // loop_footer
                  %s248 = sadd.s32 1, %s244
                $region69: #{p_y_gs_z1_z2_forward.1} parent=62 // loop_footer_branch
                  %243 = sbr.rel target = $region65
                $region70: #{p_y_gs_z1_z2_forward.1} parent=62 // loop_exit
                  _
                %s252 = ssub.s32 16, 1
                loop: start=0, step=1, limit=1
                $region71: #{p_y_gs_z1_z2_forward.1} parent=62 // loop_pre_header
                  _
                $region72: #{p_y_gs_z1_z2_forward.1} parent=62 // loop_header
                  %s254 = sphi 0, %s258
                  %p255 = scmp.ge.s32.totalorder %s254, 1
                  %s259 = sphi %s212, %s212
                  %s260 = sphi %s209, %s209
                $region73: #{p_y_gs_z1_z2_forward.1} parent=62 // loop_header_branch
                  %257 = sbr.rel (%p255) target = $region77
                $region74: #{p_y_gs_z1_z2_forward.1} parent=62 // loop_body
                  %v261 = vld [vmem:[%s259] sm:%s252]
                  %262 = vst [vmem:[%s260] sm:%s252] %v261
                  %v263 = vld [vmem:[%s259 + $0x4] sm:%s252]
                  %264 = vst [vmem:[%s260 + $0x4] sm:%s252] %v263
                  %v265 = vld [vmem:[%s259 + $0x10] sm:%s252]
                  %266 = vst [vmem:[%s260 + $0x8] sm:%s252] %v265
                  %v267 = vld [vmem:[%s259 + $0x14] sm:%s252]
                  %268 = vst [vmem:[%s260 + $0xc] sm:%s252] %v267
                  %v269 = vld [vmem:[%s259 + $0x20] sm:%s252]
                  %270 = vst [vmem:[%s260 + $0x10] sm:%s252] %v269
                  %v271 = vld [vmem:[%s259 + $0x24] sm:%s252]
                  %272 = vst [vmem:[%s260 + $0x14] sm:%s252] %v271
                $region75: #{p_y_gs_z1_z2_forward.1} parent=62 // loop_footer
                  %s258 = sadd.s32 1, %s254
                $region76: #{p_y_gs_z1_z2_forward.1} parent=62 // loop_footer_branch
                  %253 = sbr.rel target = $region72
                $region77: #{p_y_gs_z1_z2_forward.1} parent=62 // loop_exit
                  _
              $region63: #{p_y_gs_z1_z2_forward.1} parent=47 // pred_fallthru
                _
            $region48: #{p_y_gs_z1_z2_forward.1} parent=43 // pred_fallthru
              _
            // Predicated region
            $region49: #{p_y_gs_z1_z2_forward.1} parent=43 // pred_check
              _
            $region50: #{p_y_gs_z1_z2_forward.1} parent=43 // pred_check_branch
              %218 = sbr.rel (0) target = $region52
            $region51: #{p_y_gs_z1_z2_forward.1} parent=43 // pred_region
              %s220 = ssub.s32 16, 1
              loop: start=0, step=1, limit=1
              $region53: #{p_y_gs_z1_z2_forward.1} parent=51 // loop_pre_header
                _
              $region54: #{p_y_gs_z1_z2_forward.1} parent=51 // loop_header
                %s222 = sphi 0, %s226
                %p223 = scmp.ge.s32.totalorder %s222, 1
                %s227 = sphi %s212, %s212
                %s228 = sphi %s209, %s209
              $region55: #{p_y_gs_z1_z2_forward.1} parent=51 // loop_header_branch
                %225 = sbr.rel (%p223) target = $region59
              $region56: #{p_y_gs_z1_z2_forward.1} parent=51 // loop_body
                %v229 = vld [vmem:[%s227] sm:%s220]
                %230 = vst [vmem:[%s228] sm:%s220] %v229
                %v231 = vld [vmem:[%s227 + $0x4] sm:%s220]
                %232 = vst [vmem:[%s228 + $0x4] sm:%s220] %v231
                %v233 = vld [vmem:[%s227 + $0x10] sm:%s220]
                %234 = vst [vmem:[%s228 + $0x8] sm:%s220] %v233
                %v235 = vld [vmem:[%s227 + $0x14] sm:%s220]
                %236 = vst [vmem:[%s228 + $0xc] sm:%s220] %v235
                %v237 = vld [vmem:[%s227 + $0x20] sm:%s220]
                %238 = vst [vmem:[%s228 + $0x10] sm:%s220] %v237
                %v239 = vld [vmem:[%s227 + $0x24] sm:%s220]
                %240 = vst [vmem:[%s228 + $0x14] sm:%s220] %v239
              $region57: #{p_y_gs_z1_z2_forward.1} parent=51 // loop_footer
                %s226 = sadd.s32 1, %s222
              $region58: #{p_y_gs_z1_z2_forward.1} parent=51 // loop_footer_branch
                %221 = sbr.rel target = $region54
              $region59: #{p_y_gs_z1_z2_forward.1} parent=51 // loop_exit
                _
            $region52: #{p_y_gs_z1_z2_forward.1} parent=43 // pred_fallthru
              _
          $region44: #{p_y_gs_z1_z2_forward.1} parent=39 // pred_fallthru
            _
          %273 = vnop
        $region40: #{p_y_gs_z1_z2_forward.1} parent=35 // pred_fallthru
          _
      $region36: #{p_y_gs_z1_z2_forward.1} parent=5 // pred_fallthru
        _
      %p274 = scmp.le.s32.totalorder 1, %s12
      %p275 = scmp.lt.s32.totalorder %s12, 3
      %p276 = pnand %p274, %p275
      %p277 = pneg %p276
      // Predicated region
      $region78: #{p_y_gs_z1_z2_forward.1} parent=5 // pred_check
        _
      $region79: #{p_y_gs_z1_z2_forward.1} parent=5 // pred_check_branch
        %279 = sbr.rel (%p276) target = $region81
      $region80: #{p_y_gs_z1_z2_forward.1} parent=5 // pred_region
        %s280 = ssub.s32 %s12, 1
        %s281 = sand.u32 %s130, 1
        %s282 = sand.u32 %s130, 1
        %s283 = smul.addr %s282, 24
        %s284 = scalar_lea.vmem [#allocation2], %s283
        // Predicated region
        $region82: #{p_y_gs_z1_z2_forward.1} parent=80 // pred_check
          %p285 = pneg %p143
        $region83: #{p_y_gs_z1_z2_forward.1} parent=80 // pred_check_branch
          %287 = sbr.rel (%p285) target = $region85
        $region84: #{p_y_gs_z1_z2_forward.1} parent=80 // pred_region
          _
        $region85: #{p_y_gs_z1_z2_forward.1} parent=80 // pred_fallthru
          _
        %p288 = pneg %p33
        %p289 = pneg %p30
        %p290 = pneg %p54
        %p291 = pneg %p51
        %p292 = pneg %p75
        %p293 = pneg %p72
        %p294 = pneg %p96
        %p295 = pneg %p93
        %p296 = pneg %p117
        %p297 = pneg %p114
        %s298 = sand.u32 %s130, 1
        %s299 = sand.u32 %s130, 1
        %s300 = smul.addr %s299, 24
        %s301 = scalar_lea.vmem [#allocation2], %s300
        %p302 = pneg %p143
        %p303 = pneg %p140
        %p304 = pneg %p169
        %p305 = pneg %p166
        %s306 = smul.u32 2, %s17
        %p307 = scmp.lt.s32.totalorder %s306, 3
        %s308 = scalar_select %p307, %s306, 3
        %s309 = smul.addr %s308, 8
        %s310 = scalar_lea.vmem %s6, %s309
        %s311 = smul.u32 2, %s17
        %s312 = smul.u32 2, %s17
        %p313 = scmp.lt.s32.totalorder %s312, 3
        %s314 = scalar_select %p313, %s312, 3
        %s315 = smul.addr %s314, 8
        %s316 = scalar_lea.vmem %s6, %s315
        %s317 = smul.u32 2, %s17
        %v319 = vld [vmem:[%s0] sm:$0xff]
        %v320 = vld [vmem:[%s0 + $0x8] sm:$0xff]
        %v321 = vld [vmem:[%s0 + $0x10] sm:$0xff]
        %v322 = vld [vmem:[%s0 + $0x18] sm:$0xff]
        %v323 = vld [vmem:[%s1] sm:$0xff]
        %v324 = vld [vmem:[%s1 + $0x8] sm:$0xff]
        %v325 = vld [vmem:[%s1 + $0x10] sm:$0xff]
        %v326 = vld [vmem:[%s1 + $0x18] sm:$0xff]
        %v327 = vmul.f32 %v323, 0.5
        %v328 = vmul.f32 %v324, 0.5
        %v329 = vmul.f32 %v325, 0.5
        %v330 = vmul.f32 %v326, 0.5
        %v331 = vmul.f32 %v327, 1.442695
        %v332 = vpow.pop %v331
        %v333 = vmul.f32 %v328, 1.442695
        %v334 = vpow.pop %v333
        %v335 = vmul.f32 %v329, 1.442695
        %v336 = vpow.pop %v335
        %v337 = vmul.f32 %v330, 1.442695
        %v338 = vpow.pop %v337
        %v339 = vld [vmem:[%s2] sm:$0xff]
        %v340 = vld [vmem:[%s2 + $0x8] sm:$0xff]
        %v341 = vld [vmem:[%s2 + $0x10] sm:$0xff]
        %v342 = vld [vmem:[%s2 + $0x18] sm:$0xff]
        %v343 = vmul.f32 %v332, %v339
        %v344 = vmul.f32 %v334, %v340
        %v345 = vmul.f32 %v336, %v341
        %v346 = vmul.f32 %v338, %v342
        %v347 = vadd.f32 %v319, %v343
        %v348 = vadd.f32 %v320, %v344
        %v349 = vadd.f32 %v321, %v345
        %v350 = vadd.f32 %v322, %v346
        %v351 = vld [vmem:[%s3] sm:$0xff]
        %v352 = vld [vmem:[%s3 + $0x8] sm:$0xff]
        %v353 = vld [vmem:[%s3 + $0x10] sm:$0xff]
        %v354 = vld [vmem:[%s3 + $0x18] sm:$0xff]
        %vm355 = vcmask 261120
        %v357 = vsel %vm355, %v347, 0
        %v360 = vsel %vm355, %v348, 0
        %v363 = vsel %vm355, %v349, 0
        %v366 = vsel %vm355, %v350, 0
        %368 = vmatpush.msra.mxu0 0.0
        %369 = vmatpush.msra.mxu0 0.0
        %370 = vmatpush.msra.mxu0 0.0
        %371 = vmatpush.msra.mxu0 0.0
        %372 = vmatpush.msra.mxu0 0.0
        %373 = vmatpush.msra.mxu0 0.0
        %374 = vmatpush.msra.mxu0 0.0
        %375 = vmatpush.msra.mxu0 0.0
        %376 = vmatpush.msra.mxu0 0.0
        %377 = vmatpush.msra.mxu0 0.0
        %378 = vmatpush.msra.mxu0 0.0
        %379 = vmatpush.msra.mxu0 0.0
        %380 = vmatpush.msra.mxu0 %v354
        %381 = vmatpush.msra.mxu0 %v353
        %382 = vmatpush.msra.mxu0 %v352
        %383 = vmatpush.msra.mxu0 %v351
        %384 = vmatmul.f32.gmra.mxu0 %v357
        %v385 = vpop.f32.mrf.mxu0
        %v386 = vadd.f32 0.0, %v385
        %387 = vmatmul.f32.gmra.mxu0 %v360
        %v388 = vpop.f32.mrf.mxu0
        %v389 = vadd.f32 0.0, %v388
        %390 = vmatmul.f32.gmra.mxu0 %v363
        %v391 = vpop.f32.mrf.mxu0
        %v392 = vadd.f32 0.0, %v391
        %393 = vmatmul.f32.gmra.mxu0 %v366
        %v394 = vpop.f32.mrf.mxu0
        %v395 = vadd.f32 0.0, %v394
        %396 = vdwg.mxu0
        %v397 = vpack.c.bf16 %v389, %v386
        %v398 = vpack.c.bf16 %v395, %v392
        %v399 = vld [vmem:[%s284] sm:$0xf]
        %v400 = vld [vmem:[%s284 + $0x4] sm:$0xf]
        %v401 = vunpack.c.l.bf16 %v399
        %v402 = vunpack.c.l.bf16 %v400
        %s403 = scalar_lea.vmem %s284, 8 [#allocation2]
        %v404 = vld [vmem:[%s403] sm:$0xf]
        %v405 = vld [vmem:[%s403 + $0x4] sm:$0xf]
        %v406 = vunpack.c.l.bf16 %v404
        %v407 = vunpack.c.l.bf16 %v405
        %v408 = vadd.f32 %v401, %v406
        %v409 = vadd.f32 %v402, %v407
        %s410 = scalar_lea.vmem %s284, 16 [#allocation2]
        %v411 = vld [vmem:[%s410] sm:$0xf]
        %v412 = vld [vmem:[%s410 + $0x4] sm:$0xf]
        %v413 = vunpack.c.l.bf16 %v411
        %v414 = vunpack.c.l.bf16 %v412
        %v415 = vadd.f32 %v408, %v413
        %v416 = vadd.f32 %v409, %v414
        %v417 = vpack.c.bf16 %v416, %v415
        %v418 = vld [vmem:[%s4] sm:$0x1]
        %v420 = vperm.slane %v418, 0
        %v423 = vsel %vm355, %v417, 0
        %425 = vmatpush.bf16.msra.mxu0 0
        %426 = vmatpush.bf16.msra.mxu0 0
        %427 = vmatpush.bf16.msra.mxu0 0
        %428 = vmatpush.bf16.msra.mxu0 0
        %429 = vmatpush.bf16.msra.mxu0 0
        %430 = vmatpush.bf16.msra.mxu0 0
        %431 = vmatpush.bf16.msra.mxu0 %v398
        %432 = vmatpush.bf16.msra.mxu0 %v397
        %433 = vmatmul.bf16.gmra.mxu0 %v423
        %v434 = vpop.f32.mrf.mxu0
        %v435 = vadd.f32 %v420, %v434
        %v436 = vpop.f32.mrf.mxu0
        %v437 = vadd.f32 %v420, %v436
        %438 = vdwg.mxu0
        %439 = vst [vmem:[%s316] sm:$0xff] %v435
        %440 = vst [vmem:[%s316 + $0x8] sm:$0xff] %v437
        %s441 = smul.u32 2, %s17
        %p442 = scmp.lt.s32.totalorder %s441, 3
        %s443 = scalar_select %p442, %s441, 3
        %s444 = smul.addr %s443, 8
        %s445 = scalar_lea.vmem %s6, %s444
        // Predicated region
        $region86: #{p_y_gs_z1_z2_forward.1} parent=80 // pred_check
          %p446 = pneg %p166
        $region87: #{p_y_gs_z1_z2_forward.1} parent=80 // pred_check_branch
          %448 = sbr.rel (%p446) target = $region89
        $region88: #{p_y_gs_z1_z2_forward.1} parent=80 // pred_region
          %s449 = smul.u32 2, %s17
        $region89: #{p_y_gs_z1_z2_forward.1} parent=80 // pred_fallthru
          _
      $region81: #{p_y_gs_z1_z2_forward.1} parent=5 // pred_fallthru
        _
      %p450 = scmp.le.s32.totalorder 2, %s12
      // Predicated region
      $region90: #{p_y_gs_z1_z2_forward.1} parent=5 // pred_check
        %p451 = pneg %p450
      $region91: #{p_y_gs_z1_z2_forward.1} parent=5 // pred_check_branch
        %453 = sbr.rel (%p451) target = $region93
      $region92: #{p_y_gs_z1_z2_forward.1} parent=5 // pred_region
        %s454 = ssub.s32 %s12, 2
        // Predicated region
        $region94: #{p_y_gs_z1_z2_forward.1} parent=92 // pred_check
          %p455 = pneg %p172
        $region95: #{p_y_gs_z1_z2_forward.1} parent=92 // pred_check_branch
          %457 = sbr.rel (%p455) target = $region97
        $region96: #{p_y_gs_z1_z2_forward.1} parent=92 // pred_region
          %s458 = smul.u32 2, %s18
          %p459 = scmp.lt.s32.totalorder %s458, 3
          %s460 = scalar_select %p459, %s458, 3
          %s461 = smul.addr %s460, 8
          %s462 = scalar_lea.vmem %s6, %s461
        $region97: #{p_y_gs_z1_z2_forward.1} parent=92 // pred_fallthru
          _
      $region93: #{p_y_gs_z1_z2_forward.1} parent=5 // pred_fallthru
        _
    $region6: #{p_y_gs_z1_z2_forward.1} parent=1 // loop_footer
      %s16 = sadd.s32 1, %s12
    $region7: #{p_y_gs_z1_z2_forward.1} parent=1 // loop_footer_branch
      %11 = sbr.rel target = $region3
    $region8: #{p_y_gs_z1_z2_forward.1} parent=1 // loop_exit
      _

</llo_original>
